<compile_context>
chip_gen: v7x
topology: tpu7x:2x2x1
jax: 0.10.0
libtpu: 0.0.40
codegen_flags: <defaults>
</compile_context>

<pallas_src>
import jax
import jax.numpy as jnp
from jax import lax
from jax.experimental import pallas as pl
from jax.experimental.pallas import tpu as pltpu

_LANE = 128
_SUB = 8
# Per-grid-step HBM working set (bytes, summed over every fused input).
_STEP_BYTES = 8 * 1024 * 1024
_MAX_T_BLOCK = 64 * 1024
# Explicit scoped-VMEM limit: v5e's default (16 MiB) would reject the larger
# double-buffered tiles; 40 MiB is safely below v7x's 64 MiB physical VMEM.
_VMEM_LIMIT_BYTES = 40 * 1024 * 1024


def _choose_time_block(bytes_per_col: int, t: int) -> int:
    """Time-block width: the full time axis, or a lane-aligned multiple of 128."""
    budget = max(_LANE, _STEP_BYTES // max(bytes_per_col, 1))
    cap = min(budget, _MAX_T_BLOCK)
    if t <= cap:
        return t                                   # full-width block (always legal)
    return max(_LANE, (cap // _LANE) * _LANE)      # lane-aligned block


def _make_kernel(num_logs: int, t_blk: int, need_mask: bool, tail_valid: int):
    """refs = (z, log_s_0..log_s_{k-1}, zz_out, ls_out, zz_acc, ls_acc)."""

    def accumulate(acc_ref, src_ref, mask, square):
        # Fold a (rows, t_blk) input into the (8, t_blk) accumulator, 8-row
        # slab at a time (pure VPU adds; cast/square/mask per slab).
        rows = src_ref.shape[0]

        def proc(lo, hi):
            v = src_ref[lo:hi, :].astype(jnp.float32)
            if square:
                v = v * v
            if mask is not None:
                v = jnp.where(mask, v, 0.0)
            return v

        n8 = rows // _SUB
        if n8:
            slab = proc(0, _SUB)
            for g in range(1, n8):
                slab = slab + proc(g * _SUB, (g + 1) * _SUB)
            acc_ref[...] += slab
        rem = rows - n8 * _SUB
        if rem:
            acc_ref[0:rem, :] += proc(n8 * _SUB, rows)

    def kernel(*refs):
        z_ref = refs[0]
        ls_refs = refs[1:1 + num_logs]
        zz_out_ref = refs[1 + num_logs]
        ls_out_ref = refs[2 + num_logs]
        zz_acc = refs[3 + num_logs]
        ls_acc = refs[4 + num_logs]

        s = pl.program_id(0)
        last = pl.num_programs(0) - 1

        @pl.when(s == 0)
        def _init():
            zz_acc[...] = jnp.zeros_like(zz_acc)
            ls_acc[...] = jnp.zeros_like(ls_acc)
            zz_out_ref[...] = jnp.zeros_like(zz_out_ref)
            ls_out_ref[...] = jnp.zeros_like(ls_out_ref)

        def step_body(mask):
            accumulate(zz_acc, z_ref, mask, square=True)
            for r in ls_refs:
                accumulate(ls_acc, r, mask, square=False)

        if need_mask:
            # Only the ragged tail block needs masking; every other step runs
            # the mask-free body.
            @pl.when(s == last)
            def _tail():
                lane = lax.broadcasted_iota(jnp.int32, (1, t_blk), 1)
                step_body(lane < tail_valid)

            @pl.when(s != last)
            def _main():
                step_body(None)
        else:
            step_body(None)

        @pl.when(s == last)
        def _finalize():
            # One-time XLU cross-lane + sublane reduce, hidden under the
            # mem-bound roofline; writes the two scalar outputs.
            zz_out_ref[...] = jnp.sum(zz_acc[...], keepdims=True)
            ls_out_ref[...] = jnp.sum(ls_acc[...], keepdims=True)

    return kernel


def waveglow_loss(z, log_s_list, log_det_W_list, sigma: float = 1.0,
                  *, time_block=None):
    """Replicates WaveGlowLoss.forward.

    Returns (loss / (B*C*T), sum(z*z), B*C*T, log_det_W_log_s_total).
    # TODO(synk): the PyTorch .item() host-scalar conversions are returned as
    # JAX 0-d float32 arrays instead of Python floats.
    """
    assert z.ndim == 3, "z must be (batch, n_group, time)"
    assert len(log_s_list) == len(log_det_W_list) and len(log_s_list) >= 1
    t = z.shape[-1]
    for ls in log_s_list:
        assert ls.shape[-1] == t, "all log_s tensors must share z's time axis"

    # Collapse leading dims -> (rows, T).  Pure leading-dim reshape: no copy.
    z2 = z.reshape(-1, t)
    ls2 = [ls.reshape(-1, ls.shape[-1]) for ls in log_s_list]

    # Dtype-aware bytes per time-column across all fused inputs.
    bytes_per_col = (z2.shape[0] * z2.dtype.itemsize
                     + sum(x.shape[0] * x.dtype.itemsize for x in ls2))

    if time_block is None:
        t_blk = _choose_time_block(bytes_per_col, t)
    else:
        t_blk = int(time_block)
        assert t_blk == t or (t_blk % _LANE == 0 and t_blk <= t)

    steps = -(-t // t_blk)
    need_mask = steps * t_blk != t
    tail_valid = t - (steps - 1) * t_blk

    in_specs = [pl.BlockSpec((z2.shape[0], t_blk), lambda s: (0, s))]
    for x in ls2:
        in_specs.append(pl.BlockSpec((x.shape[0], t_blk), lambda s: (0, s)))

    out_specs = (pl.BlockSpec((1, 1), lambda s: (0, 0)),
                 pl.BlockSpec((1, 1), lambda s: (0, 0)))
    out_shape = (jax.ShapeDtypeStruct((1, 1), jnp.float32),
                 jax.ShapeDtypeStruct((1, 1), jnp.float32))

    kernel = _make_kernel(len(ls2), t_blk, need_mask, tail_valid)

    zz_out, ls_out = pl.pallas_call(
        kernel,
        out_shape=out_shape,
        grid_spec=pltpu.PrefetchScalarGridSpec(
            num_scalar_prefetch=0,
            grid=(steps,),
            in_specs=in_specs,
            out_specs=out_specs,
            scratch_shapes=[pltpu.VMEM((_SUB, t_blk), jnp.float32),
                            pltpu.VMEM((_SUB, t_blk), jnp.float32)]),
        compiler_params=pltpu.CompilerParams(
            dimension_semantics=("arbitrary",),
            vmem_limit_bytes=_VMEM_LIMIT_BYTES),
    )(z2, *ls2)

    sum_zz = zz_out[0, 0]
    log_s_total = ls_out[0, 0]

    log_det_W_total = jnp.float32(0.0)
    for w in log_det_W_list:
        log_det_W_total = log_det_W_total + jnp.asarray(w, jnp.float32)

    log_det_W_log_s_total = log_det_W_total + log_s_total
    loss = sum_zz / (2.0 * sigma * sigma) - log_det_W_log_s_total
    denom = z.shape[0] * z.shape[1] * z.shape[2]
    return loss / denom, sum_zz, denom, log_det_W_log_s_total


def _reference(z, log_s_list, log_det_W_list, sigma=1.0):
    total = None
    for i, ls in enumerate(log_s_list):
        term = jnp.asarray(log_det_W_list[i], jnp.float32) + jnp.sum(ls)
        total = term if total is None else total + term
    szz = jnp.sum(z * z)
    denom = z.shape[0] * z.shape[1] * z.shape[2]
    return (szz / (2.0 * sigma * sigma) - total) / denom, szz, denom, total


if __name__ == "__main__":
    key = jax.random.PRNGKey(0)
    kz, k1, k2, k3, kw = jax.random.split(key, 5)

    # Small WaveGlow-like shapes: z (batch=2, n_group=4, time=16)
    B, C, T = 2, 4, 16
    z = jax.random.normal(kz, (B, C, T), jnp.float32)
    log_s_list = [
        jax.random.normal(k1, (B, 2, T), jnp.float32) * 0.1,
        jax.random.normal(k2, (B, 2, T), jnp.float32) * 0.1,
        jax.random.normal(k3, (B, 4, T), jnp.float32) * 0.1,
    ]
    log_det_W_list = list(jax.random.normal(kw, (3,), jnp.float32) * 0.05)

    out = waveglow_loss(z, log_s_list, log_det_W_list, sigma=1.0)
    jax.block_until_ready((out[0], out[1], out[3]))
    ref = _reference(z, log_s_list, log_det_W_list, sigma=1.0)
    assert jnp.allclose(out[0], ref[0], rtol=1e-5, atol=1e-5)
    assert jnp.allclose(out[1], ref[1], rtol=1e-5, atol=1e-5)
    assert out[2] == ref[2]
    assert jnp.allclose(out[3], ref[3], rtol=1e-5, atol=1e-5)

    # Second config: multi-step grid with a ragged time tail (masked last step)
    # and row counts that exercise both the 8-row-slab and remainder paths.
    T2 = 300
    kz2, ka, kb, kw2 = jax.random.split(jax.random.PRNGKey(1), 4)
    z_b = jax.random.normal(kz2, (2, 4, T2), jnp.float32)
    ls_b = [jax.random.normal(ka, (2, 2, T2), jnp.float32) * 0.1,
            jax.random.normal(kb, (2, 4, T2), jnp.float32) * 0.1]
    ldw_b = list(jax.random.normal(kw2, (2,), jnp.float32) * 0.05)
    out_b = waveglow_loss(z_b, ls_b, ldw_b, sigma=0.7, time_block=128)
    jax.block_until_ready((out_b[0], out_b[1], out_b[3]))
    ref_b = _reference(z_b, ls_b, ldw_b, sigma=0.7)
    assert jnp.allclose(out_b[0], ref_b[0], rtol=1e-5, atol=1e-5)
    assert jnp.allclose(out_b[1], ref_b[1], rtol=1e-5, atol=1e-5)
    assert out_b[2] == ref_b[2]
    assert jnp.allclose(out_b[3], ref_b[3], rtol=1e-5, atol=1e-5)

    print("KERNEL_OK")
</pallas_src>

<mosaic_0001>
module attributes {stable_mosaic.version = 11 : i64} {
  func.func @kernel(%arg0: i32, %arg1: memref<8x16xf32, #tpu.memory_space<vmem>>, %arg2: memref<4x16xf32, #tpu.memory_space<vmem>>, %arg3: memref<4x16xf32, #tpu.memory_space<vmem>>, %arg4: memref<8x16xf32, #tpu.memory_space<vmem>>, %arg5: memref<1x1xf32, #tpu.memory_space<vmem>>, %arg6: memref<1x1xf32, #tpu.memory_space<vmem>>, %arg7: memref<8x16xf32, #tpu.memory_space<vmem>>, %arg8: memref<8x16xf32, #tpu.memory_space<vmem>>) attributes {dimension_semantics = [#tpu.dimension_semantics<arbitrary>], iteration_bounds = array<i64: 1>, scalar_prefetch = 0 : i64, scratch_operands = 2 : i64, tpu.core_type = #tpu.core_type<tc>, window_params = [{transform_indices = @transform_0, window_bounds = array<i64: 8, 16>}, {transform_indices = @transform_1, window_bounds = array<i64: 4, 16>}, {transform_indices = @transform_2, window_bounds = array<i64: 4, 16>}, {transform_indices = @transform_3, window_bounds = array<i64: 8, 16>}, {pipeline_mode = #tpu.pipeline_mode<synchronous>, transform_indices = @transform_4, window_bounds = array<i64: 1, 1>}, {pipeline_mode = #tpu.pipeline_mode<synchronous>, transform_indices = @transform_5, window_bounds = array<i64: 1, 1>}]} {
    %c0_i32 = arith.constant 0 : i32
    %0 = arith.cmpi eq, %arg0, %c0_i32 : i32
    %1 = arith.extui %0 : i1 to i32
    %c0_i32_0 = arith.constant 0 : i32
    %2 = arith.cmpi ne, %1, %c0_i32_0 : i32
    scf.if %2 {
      %cst = arith.constant 0.000000e+00 : f32
      %23 = vector.broadcast %cst : f32 to vector<8x16xf32>
      %c0_26 = arith.constant 0 : index
      %c0_27 = arith.constant 0 : index
      %24 = vector.load %arg7[%c0_26, %c0_27] : memref<8x16xf32, #tpu.memory_space<vmem>>, vector<8x16xf32>
      tpu.vector_store %arg7[%c0_26, %c0_27], %23 {strides = array<i32>} : memref<8x16xf32, #tpu.memory_space<vmem>>, vector<8x16xf32>,
      %cst_28 = arith.constant 0.000000e+00 : f32
      %25 = vector.broadcast %cst_28 : f32 to vector<8x16xf32>
      %c0_29 = arith.constant 0 : index
      %c0_30 = arith.constant 0 : index
      %26 = vector.load %arg8[%c0_29, %c0_30] : memref<8x16xf32, #tpu.memory_space<vmem>>, vector<8x16xf32>
      tpu.vector_store %arg8[%c0_29, %c0_30], %25 {strides = array<i32>} : memref<8x16xf32, #tpu.memory_space<vmem>>, vector<8x16xf32>,
      %cst_31 = arith.constant 0.000000e+00 : f32
      %27 = vector.broadcast %cst_31 : f32 to vector<1x1xf32>
      %c0_32 = arith.constant 0 : index
      %c0_33 = arith.constant 0 : index
      %28 = vector.load %arg5[%c0_32, %c0_33] : memref<1x1xf32, #tpu.memory_space<vmem>>, vector<1x1xf32>
      tpu.vector_store %arg5[%c0_32, %c0_33], %27 {strides = array<i32>} : memref<1x1xf32, #tpu.memory_space<vmem>>, vector<1x1xf32>,
      %cst_34 = arith.constant 0.000000e+00 : f32
      %29 = vector.broadcast %cst_34 : f32 to vector<1x1xf32>
      %c0_35 = arith.constant 0 : index
      %c0_36 = arith.constant 0 : index
      %30 = vector.load %arg6[%c0_35, %c0_36] : memref<1x1xf32, #tpu.memory_space<vmem>>, vector<1x1xf32>
      tpu.vector_store %arg6[%c0_35, %c0_36], %29 {strides = array<i32>} : memref<1x1xf32, #tpu.memory_space<vmem>>, vector<1x1xf32>,
    } else {
    }
    %c0 = arith.constant 0 : index
    %c0_1 = arith.constant 0 : index
    %3 = vector.load %arg1[%c0, %c0_1] : memref<8x16xf32, #tpu.memory_space<vmem>>, vector<8x16xf32>
    %4 = arith.mulf %3, %3 : vector<8x16xf32>
    %c0_2 = arith.constant 0 : index
    %c0_3 = arith.constant 0 : index
    %5 = vector.load %arg7[%c0_2, %c0_3] : memref<8x16xf32, #tpu.memory_space<vmem>>, vector<8x16xf32>
    %6 = arith.addf %5, %4 : vector<8x16xf32>
    %c0_4 = arith.constant 0 : index
    %c0_5 = arith.constant 0 : index
    %7 = vector.load %arg7[%c0_4, %c0_5] : memref<8x16xf32, #tpu.memory_space<vmem>>, vector<8x16xf32>
    tpu.vector_store %arg7[%c0_4, %c0_5], %6 {strides = array<i32>} : memref<8x16xf32, #tpu.memory_space<vmem>>, vector<8x16xf32>,
    %c0_6 = arith.constant 0 : index
    %c0_7 = arith.constant 0 : index
    %8 = vector.load %arg8[%c0_6, %c0_7] : memref<8x16xf32, #tpu.memory_space<vmem>>, vector<4x16xf32>
    %c0_8 = arith.constant 0 : index
    %c0_9 = arith.constant 0 : index
    %9 = vector.load %arg2[%c0_8, %c0_9] : memref<4x16xf32, #tpu.memory_space<vmem>>, vector<4x16xf32>
    %10 = arith.addf %8, %9 : vector<4x16xf32>
    %c0_10 = arith.constant 0 : index
    %c0_11 = arith.constant 0 : index
    %11 = vector.load %arg8[%c0_10, %c0_11] : memref<8x16xf32, #tpu.memory_space<vmem>>, vector<4x16xf32>
    tpu.vector_store %arg8[%c0_10, %c0_11], %10 {strides = array<i32>} : memref<8x16xf32, #tpu.memory_space<vmem>>, vector<4x16xf32>,
    %c0_12 = arith.constant 0 : index
    %c0_13 = arith.constant 0 : index
    %12 = vector.load %arg8[%c0_12, %c0_13] : memref<8x16xf32, #tpu.memory_space<vmem>>, vector<4x16xf32>
    %c0_14 = arith.constant 0 : index
    %c0_15 = arith.constant 0 : index
    %13 = vector.load %arg3[%c0_14, %c0_15] : memref<4x16xf32, #tpu.memory_space<vmem>>, vector<4x16xf32>
    %14 = arith.addf %12, %13 : vector<4x16xf32>
    %c0_16 = arith.constant 0 : index
    %c0_17 = arith.constant 0 : index
    %15 = vector.load %arg8[%c0_16, %c0_17] : memref<8x16xf32, #tpu.memory_space<vmem>>, vector<4x16xf32>
    tpu.vector_store %arg8[%c0_16, %c0_17], %14 {strides = array<i32>} : memref<8x16xf32, #tpu.memory_space<vmem>>, vector<4x16xf32>,
    %c0_18 = arith.constant 0 : index
    %c0_19 = arith.constant 0 : index
    %16 = vector.load %arg4[%c0_18, %c0_19] : memref<8x16xf32, #tpu.memory_space<vmem>>, vector<8x16xf32>
    %c0_20 = arith.constant 0 : index
    %c0_21 = arith.constant 0 : index
    %17 = vector.load %arg8[%c0_20, %c0_21] : memref<8x16xf32, #tpu.memory_space<vmem>>, vector<8x16xf32>
    %18 = arith.addf %17, %16 : vector<8x16xf32>
    %c0_22 = arith.constant 0 : index
    %c0_23 = arith.constant 0 : index
    %19 = vector.load %arg8[%c0_22, %c0_23] : memref<8x16xf32, #tpu.memory_space<vmem>>, vector<8x16xf32>
    tpu.vector_store %arg8[%c0_22, %c0_23], %18 {strides = array<i32>} : memref<8x16xf32, #tpu.memory_space<vmem>>, vector<8x16xf32>,
    %c0_i32_24 = arith.constant 0 : i32
    %20 = arith.cmpi eq, %arg0, %c0_i32_24 : i32
    %21 = arith.extui %20 : i1 to i32
    %c0_i32_25 = arith.constant 0 : i32
    %22 = arith.cmpi ne, %21, %c0_i32_25 : i32
    scf.if %22 {
      %c0_26 = arith.constant 0 : index
      %c0_27 = arith.constant 0 : index
      %23 = vector.load %arg7[%c0_26, %c0_27] : memref<8x16xf32, #tpu.memory_space<vmem>>, vector<8x16xf32>
      %24 = vector.shape_cast %23 : vector<8x16xf32> to vector<1x8x16xf32>
      %cst = arith.constant dense<0.000000e+00> : vector<1xf32>
      %25 = vector.multi_reduction <add>, %24, %cst [1, 2] : vector<1x8x16xf32> to vector<1xf32>
      %26 = vector.shape_cast %25 : vector<1xf32> to vector<1x1x1xf32>
      %27 = vector.extract %26[0, 0, 0] : f32 from vector<1x1x1xf32>
      %28 = vector.broadcast %27 : f32 to vector<1x1xf32>
      %c0_28 = arith.constant 0 : index
      %c0_29 = arith.constant 0 : index
      %29 = vector.load %arg5[%c0_28, %c0_29] : memref<1x1xf32, #tpu.memory_space<vmem>>, vector<1x1xf32>
      tpu.vector_store %arg5[%c0_28, %c0_29], %28 {strides = array<i32>} : memref<1x1xf32, #tpu.memory_space<vmem>>, vector<1x1xf32>,
      %c0_30 = arith.constant 0 : index
      %c0_31 = arith.constant 0 : index
      %30 = vector.load %arg8[%c0_30, %c0_31] : memref<8x16xf32, #tpu.memory_space<vmem>>, vector<8x16xf32>
      %31 = vector.shape_cast %30 : vector<8x16xf32> to vector<1x8x16xf32>
      %cst_32 = arith.constant dense<0.000000e+00> : vector<1xf32>
      %32 = vector.multi_reduction <add>, %31, %cst_32 [1, 2] : vector<1x8x16xf32> to vector<1xf32>
      %33 = vector.shape_cast %32 : vector<1xf32> to vector<1x1x1xf32>
      %34 = vector.extract %33[0, 0, 0] : f32 from vector<1x1x1xf32>
      %35 = vector.broadcast %34 : f32 to vector<1x1xf32>
      %c0_33 = arith.constant 0 : index
      %c0_34 = arith.constant 0 : index
      %36 = vector.load %arg6[%c0_33, %c0_34] : memref<1x1xf32, #tpu.memory_space<vmem>>, vector<1x1xf32>
      tpu.vector_store %arg6[%c0_33, %c0_34], %35 {strides = array<i32>} : memref<1x1xf32, #tpu.memory_space<vmem>>, vector<1x1xf32>,
    } else {
    }
    return
  }
  func.func @transform_0(%arg0: i32) -> (i32, i32) {
    %c0_i32 = arith.constant 0 : i32
    %c0_i32_0 = arith.constant 0 : i32
    return %c0_i32, %arg0 : i32, i32
  }
  func.func @transform_1(%arg0: i32) -> (i32, i32) {
    %c0_i32 = arith.constant 0 : i32
    %c0_i32_0 = arith.constant 0 : i32
    return %c0_i32, %arg0 : i32, i32
  }
  func.func @transform_2(%arg0: i32) -> (i32, i32) {
    %c0_i32 = arith.constant 0 : i32
    %c0_i32_0 = arith.constant 0 : i32
    return %c0_i32, %arg0 : i32, i32
  }
  func.func @transform_3(%arg0: i32) -> (i32, i32) {
    %c0_i32 = arith.constant 0 : i32
    %c0_i32_0 = arith.constant 0 : i32
    return %c0_i32, %arg0 : i32, i32
  }
  func.func @transform_4(%arg0: i32) -> (i32, i32) {
    %c0_i32 = arith.constant 0 : i32
    %c0_i32_0 = arith.constant 0 : i32
    %c0_i32_1 = arith.constant 0 : i32
    return %c0_i32, %c0_i32_0 : i32, i32
  }
  func.func @transform_5(%arg0: i32) -> (i32, i32) {
    %c0_i32 = arith.constant 0 : i32
    %c0_i32_0 = arith.constant 0 : i32
    %c0_i32_1 = arith.constant 0 : i32
    return %c0_i32, %c0_i32_0 : i32, i32
  }
}

</mosaic_0001>

<llo_original>
// kernel: tpu_custom_call.1
$region0: #{tpu_custom_call.1}
  #allocation0 [shape = 'u32[]', space=smem, size = 0x4, offset = 0x4, fixed_abs, tag = 'smem constant byte address 0x4 - core index']
  #allocation1 [shape = 'u32[144,128]{1,0:T(1,128)}', space=vmem, size = 0x12000, scoped, tag = 'internal scratch']
  #allocation2 [shape = 'f32[8,16]{1,0:T(8,128)}', space=vmem, size = 0x1000, scoped, tag = 'scratch operand']
  #allocation3 [shape = 'f32[8,16]{1,0:T(8,128)}', space=vmem, size = 0x1000, scoped, tag = 'scratch operand']
  %s0 = inlined_call_operand.hbm [shape: f32[8,16], index: 0, kind: input, shape index: {}]
  %s1 = inlined_call_operand.hbm [shape: f32[4,16], index: 1, kind: input, shape index: {}]
  %s2 = inlined_call_operand.hbm [shape: f32[4,16], index: 2, kind: input, shape index: {}]
  %s3 = inlined_call_operand.vmem [shape: f32[8,16], index: 3, kind: input, shape index: {}]
  %s4 = inlined_call_operand.hbm [shape: f32[1,1], index: 4, kind: output, shape index: {0}]
  %s5 = inlined_call_operand.hbm [shape: f32[1,1], index: 5, kind: output, shape index: {1}]
  %6 = xla_tuple %s4, %s5
  %s7 = sld [smem:[#allocation0]]
  $region54: #{tpu_custom_call.1} parent=0
    _
  %s9 = ssub.s32 1, %s7
  %s10 = scalar_select 0, %s9, %s7
  $region1: #{tpu_custom_call.1} parent=0
    #allocation4 [shape = 'u8[4096]{0}', space=vmem, size = 0x1000, scoped, tag = 'input window, operand 0, single buffered']
    #allocation5 [shape = 's32[1]{0}', space=sflag, size = 0x4, scoped, tag = 'scoped memory for tpu_custom_call.1']
    #allocation6 [shape = 's32[1]{0}', space=sflag, size = 0x4, scoped, tag = 'scoped memory for tpu_custom_call.1']
    #allocation7 [shape = 'u8[2048]{0}', space=vmem, size = 0x800, scoped, tag = 'input window, operand 1, single buffered']
    #allocation8 [shape = 's32[1]{0}', space=sflag, size = 0x4, scoped, tag = 'scoped memory for tpu_custom_call.1']
    #allocation9 [shape = 'u8[2048]{0}', space=vmem, size = 0x800, scoped, tag = 'input window, operand 2, single buffered']
    #allocation10 [shape = 'u8[512]{0}', space=vmem, size = 0x400, scoped, tag = 'output window, operand 0, single buffered']
    #allocation11 [shape = 'u8[512]{0}', space=vmem, size = 0x400, scoped, tag = 'output window, operand 1, single buffered']
    #allocation12 [shape = 's32[1]{0}', space=sflag, size = 0x4, scoped, tag = 'scoped memory for tpu_custom_call.1']
    %11 = vsyncpa [#allocation5], 0
    %12 = vsyncpa [#allocation8], 0
    %13 = vsyncpa [#allocation6], 0
    %14 = vsyncpa [#allocation12], 0
    // Predicated region
    $region2: #{tpu_custom_call.1} parent=1 // pred_check
      _
    $region3: #{tpu_custom_call.1} parent=1 // pred_check_branch
      %16 = sbr.rel (0) target = $region5
    $region4: #{tpu_custom_call.1} parent=1 // pred_region
      %s18 = ssub.s32 128, 128
      %19 = vsyncadd [#allocation5], %s18
      %s21 = sshll.u32 [#allocation4], 4
      %s22 = int_to_ptr.vmem [resolvable:$true] %s21
      %24 = dma.hbm_to_vmem [thread:$0]  %s0, 128, %s22, [#allocation5]
    $region5: #{tpu_custom_call.1} parent=1 // pred_fallthru
      _
    // Predicated region
    $region6: #{tpu_custom_call.1} parent=1 // pred_check
      _
    $region7: #{tpu_custom_call.1} parent=1 // pred_check_branch
      %26 = sbr.rel (0) target = $region9
    $region8: #{tpu_custom_call.1} parent=1 // pred_region
      %s28 = ssub.s32 64, 64
      %29 = vsyncadd [#allocation8], %s28
      %s31 = sshll.u32 [#allocation7], 4
      %s32 = int_to_ptr.vmem [resolvable:$true] %s31
      %34 = dma.hbm_to_vmem [thread:$0]  %s1, 64, %s32, [#allocation8]
    $region9: #{tpu_custom_call.1} parent=1 // pred_fallthru
      _
    // Predicated region
    $region10: #{tpu_custom_call.1} parent=1 // pred_check
      _
    $region11: #{tpu_custom_call.1} parent=1 // pred_check_branch
      %36 = sbr.rel (0) target = $region13
    $region12: #{tpu_custom_call.1} parent=1 // pred_region
      %s38 = ssub.s32 64, 64
      %39 = vsyncadd [#allocation8], %s38
      %s41 = sshll.u32 [#allocation9], 4
      %s42 = int_to_ptr.vmem [resolvable:$true] %s41
      %44 = dma.hbm_to_vmem [thread:$0]  %s2, 64, %s42, [#allocation8]
    $region13: #{tpu_custom_call.1} parent=1 // pred_fallthru
      _
    // Predicated region
    $region14: #{tpu_custom_call.1} parent=1 // pred_check
      _
    $region15: #{tpu_custom_call.1} parent=1 // pred_check_branch
      %46 = sbr.rel (0) target = $region17
    $region16: #{tpu_custom_call.1} parent=1 // pred_region
      _
    $region17: #{tpu_custom_call.1} parent=1 // pred_fallthru
      _
    // Predicated region
    $region18: #{tpu_custom_call.1} parent=1 // pred_check
      _
    $region19: #{tpu_custom_call.1} parent=1 // pred_check_branch
      %48 = sbr.rel (0) target = $region21
    $region20: #{tpu_custom_call.1} parent=1 // pred_region
      %49 = dma.done [#allocation5], 128
    $region21: #{tpu_custom_call.1} parent=1 // pred_fallthru
      _
    // Predicated region
    $region22: #{tpu_custom_call.1} parent=1 // pred_check
      _
    $region23: #{tpu_custom_call.1} parent=1 // pred_check_branch
      %51 = sbr.rel (0) target = $region25
    $region24: #{tpu_custom_call.1} parent=1 // pred_region
      %52 = dma.done [#allocation8], 64
    $region25: #{tpu_custom_call.1} parent=1 // pred_fallthru
      _
    // Predicated region
    $region26: #{tpu_custom_call.1} parent=1 // pred_check
      _
    $region27: #{tpu_custom_call.1} parent=1 // pred_check_branch
      %54 = sbr.rel (0) target = $region29
    $region28: #{tpu_custom_call.1} parent=1 // pred_region
      %55 = dma.done [#allocation8], 64
    $region29: #{tpu_custom_call.1} parent=1 // pred_fallthru
      _
    %p56 = scmp.eq.s32.totalorder 0, 0
    // Predicated region
    $region30: #{tpu_custom_call.1} parent=1 // pred_check
      %p57 = pneg %p56
    $region31: #{tpu_custom_call.1} parent=1 // pred_check_branch
      %59 = sbr.rel (%p57) target = $region33
    $region32: #{tpu_custom_call.1} parent=1 // pred_region
      %vm60 = vcmask 130048
      %61 = vst.msk [vmem:[#allocation2] sm:$0xff] %vm60, 0.0
      %62 = vst.msk [vmem:[#allocation3] sm:$0xff] %vm60, 0.0
      %vm63 = vcmask 0
      %64 = vst.msk [vmem:[#allocation10] sm:$0x1] %vm63, 0.0
      %65 = vst.msk [vmem:[#allocation11] sm:$0x1] %vm63, 0.0
    $region33: #{tpu_custom_call.1} parent=1 // pred_fallthru
      _
    %v66 = vld [vmem:[#allocation4] sm:$0xff]
    %v67 = vmul.f32 %v66, %v66
    %v68 = vld [vmem:[#allocation2] sm:$0xff]
    %v69 = vadd.f32 %v68, %v67
    %vm70 = vcmask 130048
    %71 = vst.msk [vmem:[#allocation2] sm:$0xff] %vm70, %v69
    %v72 = vld [vmem:[#allocation3] sm:$0xf]
    %v73 = vld [vmem:[#allocation7] sm:$0xf]
    %v74 = vadd.f32 %v72, %v73
    %vm75 = vcmask 125952
    %76 = vst.msk [vmem:[#allocation3] sm:$0xf] %vm75, %v74
    %v77 = vld [vmem:[#allocation3] sm:$0xf]
    %v78 = vld [vmem:[#allocation9] sm:$0xf]
    %v79 = vadd.f32 %v77, %v78
    %80 = vst.msk [vmem:[#allocation3] sm:$0xf] %vm75, %v79
    %v81 = vld [vmem:[%s3] sm:$0xff]
    %v82 = vld [vmem:[#allocation3] sm:$0xff]
    %v83 = vadd.f32 %v82, %v81
    %84 = vst.msk [vmem:[#allocation3] sm:$0xff] %vm70, %v83
    // Predicated region
    $region34: #{tpu_custom_call.1} parent=1 // pred_check
      %p85 = pneg %p56
    $region35: #{tpu_custom_call.1} parent=1 // pred_check_branch
      %87 = sbr.rel (%p85) target = $region37
    $region36: #{tpu_custom_call.1} parent=1 // pred_region
      %v88 = vld [vmem:[#allocation2] sm:$0xff]
      %v89 = vsel %vm70, %v88, 0.0
      %90 = vadd.xlane.f32.xlu0 %v89
      %v91 = vpop.xlane.xlu0 %90
      %v92 = vrot.slane %v91, 4
      %v93 = vadd.f32 %v91, %v92
      %v94 = vrot.slane %v93, 2
      %v95 = vadd.f32 %v93, %v94
      %v96 = vrot.slane %v95, 1
      %v97 = vadd.f32 %v95, %v96
      %s98 = vtos %v97
      %v99 = vstv %s98
      %vm100 = vcmask 0
      %101 = vst.msk [vmem:[#allocation10] sm:$0x1] %vm100, %v99
      %v102 = vld [vmem:[#allocation3] sm:$0xff]
      %v103 = vsel %vm70, %v102, 0.0
      %104 = vadd.xlane.f32.xlu0 %v103
      %v105 = vpop.xlane.xlu0 %104
      %v106 = vrot.slane %v105, 4
      %v107 = vadd.f32 %v105, %v106
      %v108 = vrot.slane %v107, 2
      %v109 = vadd.f32 %v107, %v108
      %v110 = vrot.slane %v109, 1
      %v111 = vadd.f32 %v109, %v110
      %s112 = vtos %v111
      %v113 = vstv %s112
      %114 = vst.msk [vmem:[#allocation11] sm:$0x1] %vm100, %v113
    $region37: #{tpu_custom_call.1} parent=1 // pred_fallthru
      _
    // Predicated region
    $region38: #{tpu_custom_call.1} parent=1 // pred_check
      _
    $region39: #{tpu_custom_call.1} parent=1 // pred_check_branch
      %116 = sbr.rel (0) target = $region41
    $region40: #{tpu_custom_call.1} parent=1 // pred_region
      %s118 = ssub.s32 16, 16
      %119 = vsyncadd [#allocation6], %s118
      %s121 = sshll.u32 [#allocation10], 4
      %s122 = int_to_ptr.vmem [resolvable:$true] %s121
      %124 = dma.vmem_to_hbm [thread:$0]  %s122, 16, %s4, [#allocation6]
    $region41: #{tpu_custom_call.1} parent=1 // pred_fallthru
      _
    // Predicated region
    $region42: #{tpu_custom_call.1} parent=1 // pred_check
      _
    $region43: #{tpu_custom_call.1} parent=1 // pred_check_branch
      %126 = sbr.rel (0) target = $region45
    $region44: #{tpu_custom_call.1} parent=1 // pred_region
      %s128 = ssub.s32 16, 16
      %129 = vsyncadd [#allocation12], %s128
      %s131 = sshll.u32 [#allocation11], 4
      %s132 = int_to_ptr.vmem [resolvable:$true] %s131
      %134 = dma.vmem_to_hbm [thread:$0]  %s132, 16, %s5, [#allocation12]
    $region45: #{tpu_custom_call.1} parent=1 // pred_fallthru
      _
    // Predicated region
    $region46: #{tpu_custom_call.1} parent=1 // pred_check
      _
    $region47: #{tpu_custom_call.1} parent=1 // pred_check_branch
      %136 = sbr.rel (0) target = $region49
    $region48: #{tpu_custom_call.1} parent=1 // pred_region
      %137 = dma.done [#allocation6], 16
    $region49: #{tpu_custom_call.1} parent=1 // pred_fallthru
      _
    // Predicated region
    $region50: #{tpu_custom_call.1} parent=1 // pred_check
      _
    $region51: #{tpu_custom_call.1} parent=1 // pred_check_branch
      %139 = sbr.rel (0) target = $region53
    $region52: #{tpu_custom_call.1} parent=1 // pred_region
      %140 = dma.done [#allocation12], 16
    $region53: #{tpu_custom_call.1} parent=1 // pred_fallthru
      _
    %141 = vsyncpa [#allocation5], 1
    %142 = vsyncpa [#allocation8], 1
    %143 = vsyncpa [#allocation6], 1
    %144 = vsyncpa [#allocation12], 1

</llo_original>
